<compile_context>
chip_gen: v7x
topology: tpu7x:2x2x1
jax: 0.10.0
libtpu: 0.0.40
codegen_flags: <defaults>
</compile_context>

<pallas_src>
import functools

import jax
import jax.numpy as jnp
from jax import lax
from jax.experimental import pallas as pl
from jax.experimental.pallas import tpu as pltpu

KSIZE = 5       # conv kernel size
COUT = 32       # conv out channels
HID = 64        # fc1 hidden size
HID_PAD = 128   # lane-padded hidden size
LANE = 128      # TPU lane width
SUB = 8         # TPU sublane width
VMEM_LIMIT = 48 * 1024 * 1024   # headroom under v7x's 64 MiB physical VMEM


def _round_up(n, m):
    return ((n + m - 1) // m) * m


def cnn_kernel(x_ref, wt_ref, fc_ref, out_ref, *, l_pad, pool_pad):
    """Whole forward pass for one batch tile.

    x_ref:   (TB, L_pad)       bf16 input rows (channel squeezed, zero-padded cols)
    wt_ref:  (L_pad+8, 2*PP)   bf16; rows 0:L = Toeplitz conv weights,
                               row L_pad = conv bias, other rows zero.
                               Columns: [even conv-time | odd conv-time], each half
                               channel-major == torch flatten order.
    fc_ref:  (PP+8, HID_PAD)   bf16; rows 0:P = fc1 weight (transposed, zero-padded),
                               row PP = fc1 bias, row PP+1 = fc2 weight,
                               row PP+2 col 0 = fc2 bias.
    out_ref: (1, TB)           f32 sigmoid output, batch on the lane axis.
    """
    pp = pool_pad

    # Conv1d + bias as one in-layout bf16 matmul on the raw input (f32 accumulate).
    wt = wt_ref[pl.ds(0, l_pad), :]                       # (L_pad, 2*PP) aligned view
    wtail = wt_ref[pl.ds(l_pad, 8), :]                    # (8, 2*PP) aligned tail
    cbias = wtail[0:1, :].astype(jnp.float32)             # (1, 2*PP)
    z = jnp.dot(x_ref[...], wt, preferred_element_type=jnp.float32) + cbias
    z = jnp.maximum(z, 0.0)                               # ReLU, f32

    # MaxPool1d(2): even-time half vs odd-time half (both 128-lane aligned slices).
    pooled = jnp.maximum(z[:, :pp], z[:, pp:])            # (TB, PP) f32, torch order

    # fc1 + ReLU (bf16 operands, f32 accumulate / bias / ReLU).
    fc1w = fc_ref[pl.ds(0, pp), :]                        # (PP, HID_PAD) bf16
    ftail = fc_ref[pl.ds(pp, 8), :]                       # (8, HID_PAD) aligned tail
    fc1b = ftail[0:1, :].astype(jnp.float32)              # (1, HID_PAD)
    fc2w = ftail[1:2, :]                                  # (1, HID_PAD) bf16
    fc2b = ftail[2:3, 0:1].astype(jnp.float32)            # (1, 1)
    h = jnp.dot(pooled.astype(jnp.bfloat16), fc1w,
                preferred_element_type=jnp.float32) + fc1b
    h = jnp.maximum(h, 0.0)                               # (TB, HID_PAD) f32

    # fc2: contract HID, batch lands on the lane axis -> (1, TB). Sigmoid on EUP.
    o = lax.dot_general(fc2w, h.astype(jnp.bfloat16), (((1,), (1,)), ((), ())),
                        preferred_element_type=jnp.float32) + fc2b
    out_ref[...] = pl.reciprocal(1.0 + jnp.exp(-o), approx=True)


def _pack_params(params, input_length):
    """Parameter re-layout into two bf16 VMEM slabs (runs under jit -> cached)."""
    conv_w, conv_b, fc1_w, fc1_b, fc2_w, fc2_b = params
    L = input_length
    conv_len = L - (KSIZE - 1)
    pool_len = conv_len // 2
    assert pool_len > 0
    P = COUT * pool_len                  # logical pooled features (torch 32*final)
    PP = _round_up(P, LANE)              # lane-aligned padded feature width
    L_pad = _round_up(L, SUB)            # sublane-aligned Toeplitz height

    wk = conv_w[:, 0, :].astype(jnp.float32)              # (COUT, KSIZE)
    p_idx = jnp.arange(P)
    c = p_idx // pool_len                # output channel of column p
    j = p_idx % pool_len                 # pooled time index of column p

    wt = jnp.zeros((L_pad + 8, 2 * PP), jnp.float32)
    for half in (0, 1):                  # even / odd conv-time halves
        t = 2 * j + half                 # conv output time of this column
        base = half * PP
        for k in range(KSIZE):
            wt = wt.at[t + k, base + p_idx].set(wk[c, k])
    rep = jnp.repeat(conv_b.astype(jnp.float32), pool_len)           # (P,)
    wt = wt.at[L_pad, 0:P].set(rep).at[L_pad, PP:PP + P].set(rep)    # bias row, aligned
    wt_slab = wt.astype(jnp.bfloat16)

    fc = jnp.zeros((PP + 8, HID_PAD), jnp.float32)
    fc = fc.at[0:P, 0:HID].set(fc1_w.astype(jnp.float32).T)          # (P, HID)
    fc = fc.at[PP, 0:HID].set(fc1_b.astype(jnp.float32))
    fc = fc.at[PP + 1, 0:HID].set(fc2_w[0, :].astype(jnp.float32))
    fc = fc.at[PP + 2, 0].set(fc2_b[0].astype(jnp.float32))
    fc_slab = fc.astype(jnp.bfloat16)
    return wt_slab, fc_slab, L_pad, PP


def _cnn_forward_impl(x, params):
    """x: (B, 1, L) float32, NCL layout (matches the PyTorch module)."""
    B, C, L = x.shape
    assert C == 1
    wt_slab, fc_slab, L_pad, PP = _pack_params(params, L)

    # O(L^2) Toeplitz slab guard (bf16, single-buffered).
    slab_bytes = (L_pad + 8) * 2 * PP * 2
    if slab_bytes > 40 * 1024 * 1024:
        # TODO(synk): for large seq_len, band the Toeplitz with a pooled-feature grid
        # axis or switch to a K=5 shifted-matmul accumulation (O(L) FLOPs / memory).
        raise NotImplementedError("seq_len too large for the dense Toeplitz conv slab")

    x2 = x[:, 0, :].astype(jnp.bfloat16)                  # (B, L) bf16 matmul operand
    if L_pad > L:
        x2 = jnp.pad(x2, ((0, 0), (0, L_pad - L)))        # zero cols hit zero wt rows

    # Batch tiling: single full tile up to 128 rows; 128-row "parallel" grid steps
    # beyond that (keeps the lane-dense (1, tb) output block 128-aligned, matches
    # v5e's native MXU tile, and gives v7x's two TensorCores >=2 steps to shard).
    if B <= LANE:
        tb, B_pad = B, B
    else:
        tb = LANE
        B_pad = _round_up(B, tb)
        if B_pad > B:
            x2 = jnp.pad(x2, ((0, B_pad - B), (0, 0)))

    kernel = functools.partial(cnn_kernel, l_pad=L_pad, pool_pad=PP)

    out = pl.pallas_call(
        kernel,
        out_shape=jax.ShapeDtypeStruct((1, B_pad), jnp.float32),
        grid=(B_pad // tb,),
        in_specs=[
            pl.BlockSpec((tb, L_pad), lambda i: (i, 0)),              # batch tile
            pl.BlockSpec((L_pad + 8, 2 * PP), lambda i: (0, 0),       # conv slab
                         pipeline_mode=pl.Buffered(1)),               # constant -> 1 buf
            pl.BlockSpec((PP + 8, HID_PAD), lambda i: (0, 0),         # fc slab
                         pipeline_mode=pl.Buffered(1)),               # constant -> 1 buf
        ],
        out_specs=pl.BlockSpec((1, tb), lambda i: (0, i)),
        compiler_params=pltpu.CompilerParams(
            dimension_semantics=("parallel",),
            vmem_limit_bytes=VMEM_LIMIT),
    )(x2, wt_slab, fc_slab)

    return out[:, :B].reshape(B, 1)                       # module's (B, 1) output


cnn_forward = jax.jit(_cnn_forward_impl)


def init_params(key, input_length):
    """Deterministic init, PyTorch-default-style uniform(-1/sqrt(fan_in), +)."""
    final_length = (input_length - (KSIZE - 1)) // 2
    if final_length <= 0:
        raise ValueError("input_length too small for kernel=5 & pool=2")
    ks = jax.random.split(key, 6)

    def u(k, shape, fan_in):
        bound = 1.0 / jnp.sqrt(jnp.float32(fan_in))
        return jax.random.uniform(k, shape, jnp.float32, -bound, bound)

    conv_w = u(ks[0], (COUT, 1, KSIZE), 1 * KSIZE)
    conv_b = u(ks[1], (COUT,), 1 * KSIZE)
    fc1_in = COUT * final_length
    fc1_w = u(ks[2], (HID, fc1_in), fc1_in)
    fc1_b = u(ks[3], (HID,), fc1_in)
    fc2_w = u(ks[4], (1, HID), HID)
    fc2_b = u(ks[5], (1,), HID)
    return conv_w, conv_b, fc1_w, fc1_b, fc2_w, fc2_b


def cnn_reference(x, params):
    """Pure-JAX f32 reference mirroring the PyTorch forward."""
    conv_w, conv_b, fc1_w, fc1_b, fc2_w, fc2_b = params
    B, _, L = x.shape
    conv_len = L - (KSIZE - 1)
    pool_len = conv_len // 2
    x2 = x[:, 0, :]
    patches = jnp.stack([x2[:, k:k + conv_len] for k in range(KSIZE)], axis=-1)  # (B,Lc,5)
    conv = jnp.einsum('btk,ck->bct', patches, conv_w[:, 0, :]) + conv_b[None, :, None]
    conv = jax.nn.relu(conv)                                       # (B, 32, Lc)
    pooled = jnp.max(conv[:, :, :pool_len * 2].reshape(B, COUT, pool_len, 2), axis=-1)
    flat = pooled.reshape(B, COUT * pool_len)                      # torch flatten order
    h = jax.nn.relu(flat @ fc1_w.T + fc1_b)
    o = h @ fc2_w.T + fc2_b
    return jax.nn.sigmoid(o)


if __name__ == "__main__":
    key = jax.random.PRNGKey(0)
    k_x, k_p = jax.random.split(key)

    B, L = 2, 16                                   # input_length = 16
    x = jax.random.normal(k_x, (B, 1, L), jnp.float32)
    params = init_params(k_p, L)

    out = jax.block_until_ready(cnn_forward(x, params))
    ref = cnn_reference(x, params)

    assert out.shape == (B, 1)
    assert jnp.allclose(out, ref, atol=2e-2, rtol=2e-2), (out, ref)

    print("KERNEL_OK")
</pallas_src>

<mosaic_0001>
module attributes {stable_mosaic.version = 11 : i64} {
  func.func @cnn_kernel(%arg0: i32, %arg1: memref<2x16xbf16, #tpu.memory_space<vmem>>, %arg2: memref<24x512xbf16, #tpu.memory_space<vmem>>, %arg3: memref<264x128xbf16, #tpu.memory_space<vmem>>, %arg4: memref<1x2xf32, #tpu.memory_space<vmem>>) attributes {dimension_semantics = [#tpu.dimension_semantics<parallel>], iteration_bounds = array<i64: 1>, scalar_prefetch = 0 : i64, scratch_operands = 0 : i64, tpu.core_type = #tpu.core_type<tc>, window_params = [{transform_indices = @transform_0, window_bounds = array<i64: 2, 16>}, {pipeline_mode = #tpu.pipeline_mode<synchronous>, transform_indices = @transform_1, window_bounds = array<i64: 24, 512>}, {pipeline_mode = #tpu.pipeline_mode<synchronous>, transform_indices = @transform_2, window_bounds = array<i64: 264, 128>}, {transform_indices = @transform_3, window_bounds = array<i64: 1, 2>}]} {
    %c0 = arith.constant 0 : index
    %c0_0 = arith.constant 0 : index
    %0 = vector.load %arg2[%c0, %c0_0] : memref<24x512xbf16, #tpu.memory_space<vmem>>, vector<16x512xbf16>
    %c16 = arith.constant 16 : index
    %c0_1 = arith.constant 0 : index
    %1 = vector.load %arg2[%c16, %c0_1] : memref<24x512xbf16, #tpu.memory_space<vmem>>, vector<8x512xbf16>
    %2 = vector.extract_strided_slice %1 {offsets = [0, 0], sizes = [1, 512], strides = [1, 1]} : vector<8x512xbf16> to vector<1x512xbf16>
    %3 = arith.extf %2 : vector<1x512xbf16> to vector<1x512xf32>
    %c0_2 = arith.constant 0 : index
    %c0_3 = arith.constant 0 : index
    %4 = vector.load %arg1[%c0_2, %c0_3] : memref<2x16xbf16, #tpu.memory_space<vmem>>, vector<2x16xbf16>
    %cst = arith.constant dense<0.000000e+00> : vector<2x512xf32>
    %5 = tpu.matmul %4, %0, %cst {dimension_numbers = #tpu.dot_dimension_numbers<[1], [0], [0], [1], [0, 0, 1, 1], [], []>} : vector<2x16xbf16>, vector<16x512xbf16>, vector<2x512xf32> -> vector<2x512xf32>
    %6 = vector.broadcast %3 : vector<1x512xf32> to vector<2x512xf32>
    %7 = arith.addf %5, %6 : vector<2x512xf32>
    %cst_4 = arith.constant 0.000000e+00 : f32
    %8 = vector.broadcast %cst_4 : f32 to vector<2x512xf32>
    %9 = arith.maximumf %7, %8 : vector<2x512xf32>
    %10 = vector.extract_strided_slice %9 {offsets = [0, 0], sizes = [2, 256], strides = [1, 1]} : vector<2x512xf32> to vector<2x256xf32>
    %11 = vector.extract_strided_slice %9 {offsets = [0, 256], sizes = [2, 256], strides = [1, 1]} : vector<2x512xf32> to vector<2x256xf32>
    %12 = arith.maximumf %10, %11 : vector<2x256xf32>
    %c0_5 = arith.constant 0 : index
    %c0_6 = arith.constant 0 : index
    %13 = vector.load %arg3[%c0_5, %c0_6] : memref<264x128xbf16, #tpu.memory_space<vmem>>, vector<256x128xbf16>
    %c256 = arith.constant 256 : index
    %c0_7 = arith.constant 0 : index
    %14 = vector.load %arg3[%c256, %c0_7] : memref<264x128xbf16, #tpu.memory_space<vmem>>, vector<8x128xbf16>
    %15 = vector.extract_strided_slice %14 {offsets = [0, 0], sizes = [1, 128], strides = [1, 1]} : vector<8x128xbf16> to vector<1x128xbf16>
    %16 = arith.extf %15 : vector<1x128xbf16> to vector<1x128xf32>
    %17 = vector.extract_strided_slice %14 {offsets = [1, 0], sizes = [1, 128], strides = [1, 1]} : vector<8x128xbf16> to vector<1x128xbf16>
    %18 = vector.extract_strided_slice %14 {offsets = [2, 0], sizes = [1, 1], strides = [1, 1]} : vector<8x128xbf16> to vector<1x1xbf16>
    %19 = arith.extf %18 : vector<1x1xbf16> to vector<1x1xf32>
    %20 = arith.truncf %12 : vector<2x256xf32> to vector<2x256xbf16>
    %cst_8 = arith.constant dense<0.000000e+00> : vector<2x128xf32>
    %21 = tpu.matmul %20, %13, %cst_8 {dimension_numbers = #tpu.dot_dimension_numbers<[1], [0], [0], [1], [0, 0, 1, 1], [], []>} : vector<2x256xbf16>, vector<256x128xbf16>, vector<2x128xf32> -> vector<2x128xf32>
    %22 = vector.broadcast %16 : vector<1x128xf32> to vector<2x128xf32>
    %23 = arith.addf %21, %22 : vector<2x128xf32>
    %cst_9 = arith.constant 0.000000e+00 : f32
    %24 = vector.broadcast %cst_9 : f32 to vector<2x128xf32>
    %25 = arith.maximumf %23, %24 : vector<2x128xf32>
    %26 = arith.truncf %25 : vector<2x128xf32> to vector<2x128xbf16>
    %cst_10 = arith.constant dense<0.000000e+00> : vector<1x2xf32>
    %27 = tpu.matmul %17, %26, %cst_10 {dimension_numbers = #tpu.dot_dimension_numbers<[1], [1], [0], [0], [0, 0, 1, 0], [], []>} : vector<1x128xbf16>, vector<2x128xbf16>, vector<1x2xf32> -> vector<1x2xf32>
    %28 = vector.broadcast %19 : vector<1x1xf32> to vector<1x2xf32>
    %29 = arith.addf %27, %28 : vector<1x2xf32>
    %cst_11 = arith.constant 0.000000e+00 : f32
    %30 = vector.broadcast %cst_11 : f32 to vector<1x2xf32>
    %31 = arith.subf %30, %29 : vector<1x2xf32>
    %32 = math.exp %31 : vector<1x2xf32>
    %cst_12 = arith.constant 1.000000e+00 : f32
    %33 = vector.broadcast %cst_12 : f32 to vector<1x2xf32>
    %34 = arith.addf %33, %32 : vector<1x2xf32>
    %35 = tpu.reciprocal %34 {approx = true} : vector<1x2xf32> -> vector<1x2xf32>
    %c0_13 = arith.constant 0 : index
    %c0_14 = arith.constant 0 : index
    %36 = vector.load %arg4[%c0_13, %c0_14] : memref<1x2xf32, #tpu.memory_space<vmem>>, vector<1x2xf32>
    tpu.vector_store %arg4[%c0_13, %c0_14], %35 {strides = array<i32>} : memref<1x2xf32, #tpu.memory_space<vmem>>, vector<1x2xf32>,
    return
  }
  func.func @transform_0(%arg0: i32) -> (i32, i32) {
    %c0_i32 = arith.constant 0 : i32
    %c0_i32_0 = arith.constant 0 : i32
    return %arg0, %c0_i32 : i32, i32
  }
  func.func @transform_1(%arg0: i32) -> (i32, i32) {
    %c0_i32 = arith.constant 0 : i32
    %c0_i32_0 = arith.constant 0 : i32
    %c0_i32_1 = arith.constant 0 : i32
    return %c0_i32, %c0_i32_0 : i32, i32
  }
  func.func @transform_2(%arg0: i32) -> (i32, i32) {
    %c0_i32 = arith.constant 0 : i32
    %c0_i32_0 = arith.constant 0 : i32
    %c0_i32_1 = arith.constant 0 : i32
    return %c0_i32, %c0_i32_0 : i32, i32
  }
  func.func @transform_3(%arg0: i32) -> (i32, i32) {
    %c0_i32 = arith.constant 0 : i32
    %c0_i32_0 = arith.constant 0 : i32
    return %c0_i32, %arg0 : i32, i32
  }
}

</mosaic_0001>

<llo_original>
// kernel: _cnn_forward_impl.1
$region0: #{_cnn_forward_impl.1}
  #allocation0 [shape = 'u32[]', space=smem, size = 0x4, offset = 0x4, fixed_abs, tag = 'smem constant byte address 0x4 - core index']
  #allocation1 [shape = 'u32[144,128]{1,0:T(1,128)}', space=vmem, size = 0x12000, scoped, tag = 'internal scratch']
  %s0 = inlined_call_operand.vmem [shape: bf16[2,16], index: 0, kind: input, shape index: {}]
  %s1 = inlined_call_operand.vmem [shape: bf16[24,512], index: 1, kind: input, shape index: {}]
  %s2 = inlined_call_operand.vmem [shape: bf16[264,128], index: 2, kind: input, shape index: {}]
  %s3 = inlined_call_operand.hbm [shape: f32[1,2], index: 3, kind: output, shape index: {}]
  %s4 = sld [smem:[#allocation0]]
  $region22: #{_cnn_forward_impl.1} parent=0
    _
  %s6 = ssub.s32 1, %s4
  %s7 = scalar_select 0, %s6, %s4
  $region1: #{_cnn_forward_impl.1} parent=0
    #allocation2 [shape = 'u8[512]{0}', space=vmem, size = 0x400, scoped, tag = 'output window, operand 0, single buffered']
    #allocation3 [shape = 's32[1]{0}', space=sflag, size = 0x4, scoped, tag = 'scoped memory for _cnn_forward_impl.1']
    %8 = vsyncpa [#allocation3], 0
    // Predicated region
    $region2: #{_cnn_forward_impl.1} parent=1 // pred_check
      _
    $region3: #{_cnn_forward_impl.1} parent=1 // pred_check_branch
      %10 = sbr.rel (0) target = $region5
    $region4: #{_cnn_forward_impl.1} parent=1 // pred_region
      _
    $region5: #{_cnn_forward_impl.1} parent=1 // pred_fallthru
      _
    // Predicated region
    $region6: #{_cnn_forward_impl.1} parent=1 // pred_check
      _
    $region7: #{_cnn_forward_impl.1} parent=1 // pred_check_branch
      %12 = sbr.rel (0) target = $region9
    $region8: #{_cnn_forward_impl.1} parent=1 // pred_region
      _
    $region9: #{_cnn_forward_impl.1} parent=1 // pred_fallthru
      _
    // Predicated region
    $region10: #{_cnn_forward_impl.1} parent=1 // pred_check
      _
    $region11: #{_cnn_forward_impl.1} parent=1 // pred_check_branch
      %14 = sbr.rel (0) target = $region13
    $region12: #{_cnn_forward_impl.1} parent=1 // pred_region
      _
    $region13: #{_cnn_forward_impl.1} parent=1 // pred_fallthru
      _
    %v16 = vld [vmem:[%s1] sm:$0xff]
    %v17 = vld [vmem:[%s1 + $0x8] sm:$0xff]
    %v18 = vld [vmem:[%s1 + $0x10] sm:$0xff]
    %v19 = vld [vmem:[%s1 + $0x18] sm:$0xff]
    %v20 = vld [vmem:[%s1 + $0x20] sm:$0xff]
    %v21 = vld [vmem:[%s1 + $0x28] sm:$0xff]
    %v22 = vunpack.c.l.bf16 %v20
    %v23 = vunpack.c.h.bf16 %v20
    %v24 = vunpack.c.l.bf16 %v21
    %v25 = vunpack.c.h.bf16 %v21
    %v26 = vld [vmem:[%s0] sm:$0x1]
    %v27 = vlaneseq
    %v28 = vshrl.u32 %v27, 7
    %v29 = vsub.s32 0, %v28
    %v30 = vrot.slane %v22, %v29
    %v31 = vlaneseq
    %v32 = vshrl.u32 %v31, 7
    %v33 = vsub.s32 0, %v32
    %v34 = vrot.slane %v23, %v33
    %v35 = vlaneseq
    %v36 = vshrl.u32 %v35, 7
    %v37 = vsub.s32 0, %v36
    %v38 = vrot.slane %v24, %v37
    %v39 = vlaneseq
    %v40 = vshrl.u32 %v39, 7
    %v41 = vsub.s32 0, %v40
    %v42 = vrot.slane %v25, %v41
    %v47 = vunpack.c.l.b16 %v16
    %v48 = vunpack.c.h.b16 %v16
    %v49 = vunpack.c.l.b16 %v17
    %v50 = vunpack.c.h.b16 %v17
    %v51 = vunpack.c.l.b16 %v18
    %v52 = vunpack.c.h.b16 %v18
    %v53 = vunpack.c.l.b16 %v19
    %v54 = vunpack.c.h.b16 %v19
    %v55 = vpack.c.b16 %v51, %v47
    %v56 = vpack.c.b16 %v52, %v48
    %v57 = vpack.c.b16 %v53, %v49
    %v58 = vpack.c.b16 %v54, %v50
    %vm63 = vcmask 130048
    %v65 = vsel %vm63, %v26, 0
    %67 = vmatprep.subr.bf16.mxu0 %v56
    %68 = vmatpush1.bf16.msra.mxu0 %v55
    %69 = vmatprep.subr.bf16.mxu0 0
    %70 = vmatpush1.bf16.msra.mxu0 0
    %71 = vmatprep.subr.bf16.mxu0 0
    %72 = vmatpush1.bf16.msra.mxu0 0
    %73 = vmatprep.subr.bf16.mxu0 0
    %74 = vmatpush1.bf16.msra.mxu0 0
    %75 = vmatprep.subr.bf16.mxu0 0
    %76 = vmatpush1.bf16.msra.mxu0 0
    %77 = vmatprep.subr.bf16.mxu0 0
    %78 = vmatpush1.bf16.msra.mxu0 0
    %79 = vmatprep.subr.bf16.mxu0 0
    %80 = vmatpush1.bf16.msra.mxu0 0
    %81 = vmatprep.subr.bf16.mxu0 0
    %82 = vmatpush1.bf16.msra.mxu0 0
    %83 = vmatprep.subr.bf16.mxu0 0
    %84 = vmatpush1.bf16.msra.mxu0 0
    %85 = vmatprep.subr.bf16.mxu0 0
    %86 = vmatpush1.bf16.msra.mxu0 0
    %87 = vmatprep.subr.bf16.mxu0 0
    %88 = vmatpush1.bf16.msra.mxu0 0
    %89 = vmatprep.subr.bf16.mxu0 0
    %90 = vmatpush1.bf16.msra.mxu0 0
    %91 = vmatprep.subr.bf16.mxu0 0
    %92 = vmatpush1.bf16.msra.mxu0 0
    %93 = vmatprep.subr.bf16.mxu0 0
    %94 = vmatpush1.bf16.msra.mxu0 0
    %95 = vmatprep.subr.bf16.mxu0 0
    %96 = vmatpush1.bf16.msra.mxu0 0
    %97 = vmatprep.subr.bf16.mxu0 0
    %98 = vmatpush1.bf16.msra.mxu0 0
    %99 = vmatprep.mubr.bf16.mxu0 0
    %100 = vmatmul.mubr.bf16.gmra.mrb[0].mxu0 %v65
    %v101 = vpop.f32.mrb[0].mxu0
    %v102 = vadd.f32 %v30, %v101
    %v103 = vpop.f32.mrb[0].mxu0
    %v104 = vadd.f32 %v34, %v103
    %v105 = vpop.f32.mrb[0].mxu0
    %v106 = vpop.f32.mrb[0].mxu0
    %107 = vdwg.mxu0
    %108 = vmatprep.subr.bf16.mxu0 %v58
    %109 = vmatpush1.bf16.msra.mxu0 %v57
    %110 = vmatprep.subr.bf16.mxu0 0
    %111 = vmatpush1.bf16.msra.mxu0 0
    %112 = vmatprep.subr.bf16.mxu0 0
    %113 = vmatpush1.bf16.msra.mxu0 0
    %114 = vmatprep.subr.bf16.mxu0 0
    %115 = vmatpush1.bf16.msra.mxu0 0
    %116 = vmatprep.subr.bf16.mxu0 0
    %117 = vmatpush1.bf16.msra.mxu0 0
    %118 = vmatprep.subr.bf16.mxu0 0
    %119 = vmatpush1.bf16.msra.mxu0 0
    %120 = vmatprep.subr.bf16.mxu0 0
    %121 = vmatpush1.bf16.msra.mxu0 0
    %122 = vmatprep.subr.bf16.mxu0 0
    %123 = vmatpush1.bf16.msra.mxu0 0
    %124 = vmatprep.subr.bf16.mxu0 0
    %125 = vmatpush1.bf16.msra.mxu0 0
    %126 = vmatprep.subr.bf16.mxu0 0
    %127 = vmatpush1.bf16.msra.mxu0 0
    %128 = vmatprep.subr.bf16.mxu0 0
    %129 = vmatpush1.bf16.msra.mxu0 0
    %130 = vmatprep.subr.bf16.mxu0 0
    %131 = vmatpush1.bf16.msra.mxu0 0
    %132 = vmatprep.subr.bf16.mxu0 0
    %133 = vmatpush1.bf16.msra.mxu0 0
    %134 = vmatprep.subr.bf16.mxu0 0
    %135 = vmatpush1.bf16.msra.mxu0 0
    %136 = vmatprep.subr.bf16.mxu0 0
    %137 = vmatpush1.bf16.msra.mxu0 0
    %138 = vmatprep.subr.bf16.mxu0 0
    %139 = vmatpush1.bf16.msra.mxu0 0
    %140 = vmatprep.mubr.bf16.mxu0 0
    %141 = vmatmul.mubr.bf16.gmra.mrb[0].mxu0 %v65
    %v142 = vpop.f32.mrb[0].mxu0
    %v143 = vadd.f32 %v38, %v142
    %v144 = vpop.f32.mrb[0].mxu0
    %v145 = vadd.f32 %v42, %v144
    %v146 = vpop.f32.mrb[0].mxu0
    %v147 = vpop.f32.mrb[0].mxu0
    %148 = vdwg.mxu0
    %v149 = vmax.f32 %v102, 0.0
    %v150 = vmax.f32 %v104, 0.0
    %v151 = vmax.f32 %v143, 0.0
    %v152 = vmax.f32 %v145, 0.0
    %v153 = vmax.f32 %v149, %v151
    %v154 = vmax.f32 %v150, %v152
    %v155 = vld [vmem:[%s2] sm:$0xf]
    %v156 = vld [vmem:[%s2 + $0x4] sm:$0xf]
    %v157 = vld [vmem:[%s2 + $0x8] sm:$0xf]
    %v158 = vld [vmem:[%s2 + $0xc] sm:$0xf]
    %v159 = vld [vmem:[%s2 + $0x10] sm:$0xf]
    %v160 = vld [vmem:[%s2 + $0x14] sm:$0xf]
    %v161 = vld [vmem:[%s2 + $0x18] sm:$0xf]
    %v162 = vld [vmem:[%s2 + $0x1c] sm:$0xf]
    %v163 = vld [vmem:[%s2 + $0x20] sm:$0xf]
    %v164 = vld [vmem:[%s2 + $0x24] sm:$0xf]
    %v165 = vld [vmem:[%s2 + $0x28] sm:$0xf]
    %v166 = vld [vmem:[%s2 + $0x2c] sm:$0xf]
    %v167 = vld [vmem:[%s2 + $0x30] sm:$0xf]
    %v168 = vld [vmem:[%s2 + $0x34] sm:$0xf]
    %v169 = vld [vmem:[%s2 + $0x38] sm:$0xf]
    %v170 = vld [vmem:[%s2 + $0x3c] sm:$0xf]
    %v171 = vld [vmem:[%s2 + $0x40] sm:$0xf]
    %v172 = vld [vmem:[%s2 + $0x44] sm:$0xf]
    %v173 = vld [vmem:[%s2 + $0x48] sm:$0xf]
    %v174 = vld [vmem:[%s2 + $0x4c] sm:$0xf]
    %v175 = vld [vmem:[%s2 + $0x50] sm:$0xf]
    %v176 = vld [vmem:[%s2 + $0x54] sm:$0xf]
    %v177 = vld [vmem:[%s2 + $0x58] sm:$0xf]
    %v178 = vld [vmem:[%s2 + $0x5c] sm:$0xf]
    %v179 = vld [vmem:[%s2 + $0x60] sm:$0xf]
    %v180 = vld [vmem:[%s2 + $0x64] sm:$0xf]
    %v181 = vld [vmem:[%s2 + $0x68] sm:$0xf]
    %v182 = vld [vmem:[%s2 + $0x6c] sm:$0xf]
    %v183 = vld [vmem:[%s2 + $0x70] sm:$0xf]
    %v184 = vld [vmem:[%s2 + $0x74] sm:$0xf]
    %v185 = vld [vmem:[%s2 + $0x78] sm:$0xf]
    %v186 = vld [vmem:[%s2 + $0x7c] sm:$0xf]
    %v187 = vld [vmem:[%s2 + $0x80] sm:$0xf]
    %v188 = vunpack.c.l.bf16 %v187
    %v189 = vpack.c.bf16 %v153, %v153
    %v190 = vpack.c.bf16 %v154, %v154
    %v191 = vlaneseq
    %v192 = vshrl.u32 %v191, 7
    %v193 = vsub.s32 0, %v192
    %v194 = vrot.slane %v188, %v193
    %v227 = vunpack.c.l.b16 %v155
    %v228 = vunpack.c.l.b16 %v156
    %v229 = vunpack.c.l.b16 %v157
    %v230 = vunpack.c.l.b16 %v158
    %v231 = vunpack.c.l.b16 %v159
    %v232 = vunpack.c.l.b16 %v160
    %v233 = vunpack.c.l.b16 %v161
    %v234 = vunpack.c.l.b16 %v162
    %v235 = vunpack.c.l.b16 %v163
    %v236 = vunpack.c.l.b16 %v164
    %v237 = vunpack.c.l.b16 %v165
    %v238 = vunpack.c.l.b16 %v166
    %v239 = vunpack.c.l.b16 %v167
    %v240 = vunpack.c.l.b16 %v168
    %v241 = vunpack.c.l.b16 %v169
    %v242 = vunpack.c.l.b16 %v170
    %v243 = vunpack.c.l.b16 %v171
    %v244 = vunpack.c.l.b16 %v172
    %v245 = vunpack.c.l.b16 %v173
    %v246 = vunpack.c.l.b16 %v174
    %v247 = vunpack.c.l.b16 %v175
    %v248 = vunpack.c.l.b16 %v176
    %v249 = vunpack.c.l.b16 %v177
    %v250 = vunpack.c.l.b16 %v178
    %v251 = vunpack.c.l.b16 %v179
    %v252 = vunpack.c.l.b16 %v180
    %v253 = vunpack.c.l.b16 %v181
    %v254 = vunpack.c.l.b16 %v182
    %v255 = vunpack.c.l.b16 %v183
    %v256 = vunpack.c.l.b16 %v184
    %v257 = vunpack.c.l.b16 %v185
    %v258 = vunpack.c.l.b16 %v186
    %v259 = vpack.c.b16 %v228, %v227
    %v260 = vpack.c.b16 %v230, %v229
    %v261 = vpack.c.b16 %v232, %v231
    %v262 = vpack.c.b16 %v234, %v233
    %v263 = vpack.c.b16 %v236, %v235
    %v264 = vpack.c.b16 %v238, %v237
    %v265 = vpack.c.b16 %v240, %v239
    %v266 = vpack.c.b16 %v242, %v241
    %v267 = vpack.c.b16 %v244, %v243
    %v268 = vpack.c.b16 %v246, %v245
    %v269 = vpack.c.b16 %v248, %v247
    %v270 = vpack.c.b16 %v250, %v249
    %v271 = vpack.c.b16 %v252, %v251
    %v272 = vpack.c.b16 %v254, %v253
    %v273 = vpack.c.b16 %v256, %v255
    %v274 = vpack.c.b16 %v258, %v257
    %291 = vmatprep.subr.bf16.mxu0 0
    %292 = vmatpush1.bf16.msra.mxu0 %v259
    %293 = vmatprep.subr.bf16.mxu0 0
    %294 = vmatpush1.bf16.msra.mxu0 %v260
    %295 = vmatprep.subr.bf16.mxu0 0
    %296 = vmatpush1.bf16.msra.mxu0 %v261
    %297 = vmatprep.subr.bf16.mxu0 0
    %298 = vmatpush1.bf16.msra.mxu0 %v262
    %299 = vmatprep.subr.bf16.mxu0 0
    %300 = vmatpush1.bf16.msra.mxu0 %v263
    %301 = vmatprep.subr.bf16.mxu0 0
    %302 = vmatpush1.bf16.msra.mxu0 %v264
    %303 = vmatprep.subr.bf16.mxu0 0
    %304 = vmatpush1.bf16.msra.mxu0 %v265
    %305 = vmatprep.subr.bf16.mxu0 0
    %306 = vmatpush1.bf16.msra.mxu0 %v266
    %307 = vmatprep.subr.bf16.mxu0 0
    %308 = vmatpush1.bf16.msra.mxu0 %v267
    %309 = vmatprep.subr.bf16.mxu0 0
    %310 = vmatpush1.bf16.msra.mxu0 %v268
    %311 = vmatprep.subr.bf16.mxu0 0
    %312 = vmatpush1.bf16.msra.mxu0 %v269
    %313 = vmatprep.subr.bf16.mxu0 0
    %314 = vmatpush1.bf16.msra.mxu0 %v270
    %315 = vmatprep.subr.bf16.mxu0 0
    %316 = vmatpush1.bf16.msra.mxu0 %v271
    %317 = vmatprep.subr.bf16.mxu0 0
    %318 = vmatpush1.bf16.msra.mxu0 %v272
    %319 = vmatprep.subr.bf16.mxu0 0
    %320 = vmatpush1.bf16.msra.mxu0 %v273
    %321 = vmatprep.subr.bf16.mxu0 0
    %322 = vmatpush1.bf16.msra.mxu0 %v274
    %323 = vmatprep.mubr.bf16.mxu0 %v190
    %324 = vmatmul.mubr.bf16.gmra.mrb[0].mxu0 %v189
    %v325 = vpop.f32.mrb[0].mxu0
    %v326 = vadd.f32 %v194, %v325
    %v327 = vpop.f32.mrb[0].mxu0
    %v328 = vpop.f32.mrb[0].mxu0
    %v329 = vpop.f32.mrb[0].mxu0
    %330 = vdwg.mxu0
    %v331 = vmax.f32 %v326, 0.0
    %v332 = vpack.c.bf16 %v331, %v331
    %334 = vset.pattern.permute.xlu0 0
    %335 = vperm.xlu0 %334, %v188
    %v336 = vpop.permute.xlu0 %335
    %v338 = vunpack.c.l.b16 %v187
    %v339 = vpack.c.b16 %v338, %v338
    %v341 = vshrl.u32 %v339, 16
    %v344 = vrot.slane %v336, 2
    %346 = vmatprep.subr.bf16.mxu0 0
    %347 = vmatpush1.bf16.xpose.msra.mxu0 %v332
    %348 = vmatprep.subr.bf16.mxu0 0
    %349 = vmatpush1.bf16.xpose.msra.mxu0 0
    %350 = vmatprep.subr.bf16.mxu0 0
    %351 = vmatpush1.bf16.xpose.msra.mxu0 0
    %352 = vmatprep.subr.bf16.mxu0 0
    %353 = vmatpush1.bf16.xpose.msra.mxu0 0
    %354 = vmatprep.subr.bf16.mxu0 0
    %355 = vmatpush1.bf16.xpose.msra.mxu0 0
    %356 = vmatprep.subr.bf16.mxu0 0
    %357 = vmatpush1.bf16.xpose.msra.mxu0 0
    %358 = vmatprep.subr.bf16.mxu0 0
    %359 = vmatpush1.bf16.xpose.msra.mxu0 0
    %360 = vmatprep.subr.bf16.mxu0 0
    %361 = vmatpush1.bf16.xpose.msra.mxu0 0
    %362 = vmatprep.subr.bf16.mxu0 0
    %363 = vmatpush1.bf16.xpose.msra.mxu0 0
    %364 = vmatprep.subr.bf16.mxu0 0
    %365 = vmatpush1.bf16.xpose.msra.mxu0 0
    %366 = vmatprep.subr.bf16.mxu0 0
    %367 = vmatpush1.bf16.xpose.msra.mxu0 0
    %368 = vmatprep.subr.bf16.mxu0 0
    %369 = vmatpush1.bf16.xpose.msra.mxu0 0
    %370 = vmatprep.subr.bf16.mxu0 0
    %371 = vmatpush1.bf16.xpose.msra.mxu0 0
    %372 = vmatprep.subr.bf16.mxu0 0
    %373 = vmatpush1.bf16.xpose.msra.mxu0 0
    %374 = vmatprep.subr.bf16.mxu0 0
    %375 = vmatpush1.bf16.xpose.msra.mxu0 0
    %376 = vmatprep.subr.bf16.mxu0 0
    %377 = vmatpush1.bf16.xpose.msra.mxu0 0
    %378 = vmatprep.mubr.bf16.mxu0 0
    %379 = vmatmul.mubr.bf16.gmra.mrb[0].mxu0 %v341
    %v380 = vpop.f32.mrb[0].mxu0
    %v381 = vadd.f32 %v344, %v380
    %v382 = vpop.f32.mrb[0].mxu0
    %v383 = vpop.f32.mrb[0].mxu0
    %v384 = vpop.f32.mrb[0].mxu0
    %385 = vdwg.mxu0
    %v386 = vsub.f32 0.0, %v381
    %v387 = vmul.f32 %v386, 1.442695
    %v388 = vpow.pop %v387
    %v389 = vadd.f32 %v388, 1.0
    %v390 = vrcp.pop %v389
    %vm391 = vcmask 8192
    %392 = vst.msk [vmem:[#allocation2] sm:$0x1] %vm391, %v390
    // Predicated region
    $region14: #{_cnn_forward_impl.1} parent=1 // pred_check
      _
    $region15: #{_cnn_forward_impl.1} parent=1 // pred_check_branch
      %394 = sbr.rel (0) target = $region17
    $region16: #{_cnn_forward_impl.1} parent=1 // pred_region
      %s396 = ssub.s32 16, 16
      %397 = vsyncadd [#allocation3], %s396
      %s399 = sshll.u32 [#allocation2], 4
      %s400 = int_to_ptr.vmem [resolvable:$true] %s399
      %402 = dma.vmem_to_hbm [thread:$0]  %s400, 16, %s3, [#allocation3]
    $region17: #{_cnn_forward_impl.1} parent=1 // pred_fallthru
      _
    // Predicated region
    $region18: #{_cnn_forward_impl.1} parent=1 // pred_check
      _
    $region19: #{_cnn_forward_impl.1} parent=1 // pred_check_branch
      %404 = sbr.rel (0) target = $region21
    $region20: #{_cnn_forward_impl.1} parent=1 // pred_region
      %405 = dma.done [#allocation3], 16
    $region21: #{_cnn_forward_impl.1} parent=1 // pred_fallthru
      _
    %406 = vsyncpa [#allocation3], 1

</llo_original>
